<compile_context>
chip_gen: v5e
topology: v5e:2x2
jax: 0.10.0
libtpu: 0.0.40
codegen_flags: <defaults>
</compile_context>

<pallas_src>
import jax
import jax.numpy as jnp
from jax.experimental import pallas as pl
from jax.experimental.pallas import tpu as pltpu

_LANE = 128
_VMEM_LIMIT = 32 << 20          # explicit scoped-VMEM limit, safe on v5e/v6e/v7x


def _cdiv(a, b):
    return -(-a // b)


# ---------------------------------------------------------------------------
# Kernels
# ---------------------------------------------------------------------------

def _attn_kernel_tiled(params_ref, x_ref, o_ref, acc_ref):
    """Lane-dense path. x_ref: (1, Ct, Ts, 128); o_ref: (1, 1, Ts, 128).

    Grid = (B, spatial_tiles, channel_tiles). The innermost ("arbitrary")
    channel axis accumulates into the f32 scratch; usually channel_tiles == 1
    and both pl.when branches fire in the same step.
    """
    ci = pl.program_id(2)

    @pl.when(ci == 0)
    def _():
        acc_ref[...] = jnp.zeros_like(acc_ref)

    # Per-channel accumulation: the live f32 temporary is a single (Ts, 128)
    # slice, not a full-block upcast (matters for bf16 / int8 inputs).
    acc = acc_ref[...]
    for c in range(x_ref.shape[1]):
        acc = acc + x_ref[0, c].astype(jnp.float32)
    acc_ref[...] = acc

    @pl.when(ci == pl.num_programs(2) - 1)
    def _():
        y = acc * params_ref[0] + params_ref[1]      # scale has 1/C folded in
        o_ref[0, 0] = jnp.maximum(y, 0.0).astype(o_ref.dtype)


def _attn_kernel_flat(params_ref, x_ref, o_ref):
    """Fallback for S % 128 != 0. x_ref: (1, C, Te); o_ref: (1, 1, Te).

    The kernel is HBM-bound, so the sublane/XLU channel reduce and the
    block-sized f32 temporary are irrelevant on this (rare) path; it exists
    only so odd spatial sizes never need a padding copy of x.
    """
    s = jnp.sum(x_ref[0].astype(jnp.float32), axis=0)
    y = s * params_ref[0] + params_ref[1]
    o_ref[0, 0] = jnp.maximum(y, 0.0).astype(o_ref.dtype)


# ---------------------------------------------------------------------------
# Wrapper
# ---------------------------------------------------------------------------

def _fold_affine(conv_w, bn_gamma, bn_beta, bn_mean, bn_var, eps, C):
    inv_std = 1.0 / jnp.sqrt(jnp.asarray(bn_var, jnp.float32).reshape(()) + eps)
    g = jnp.asarray(bn_gamma, jnp.float32).reshape(()) * inv_std
    scale = jnp.asarray(conv_w, jnp.float32).reshape(()) * g / C
    bias = (jnp.asarray(bn_beta, jnp.float32).reshape(())
            - jnp.asarray(bn_mean, jnp.float32).reshape(()) * g)
    return jnp.stack([scale, bias]).astype(jnp.float32)


def _vmem_budget_bytes():
    """Total buffer budget (double-buffered in/out + f32 accumulator)."""
    try:
        vmem = pltpu.get_tpu_info().vmem_capacity_bytes
    except Exception:
        vmem = 64 << 20                      # v7x physical (smallest current gen)
    return max(8 << 20, min(24 << 20, vmem // 4))


def spatial_attention_block(x, conv_w, bn_gamma, bn_beta, bn_mean, bn_var,
                            eps=1e-5, *, max_channel_tile=None,
                            max_spatial_rows=None):
    """SpatialAttentionBlock forward (eval mode, ReLU act). x: (B,C,H,W) NCHW.

    Returns the (B, 1, H, W) attention map.
    # TODO(synk): if the caller consumes x * y (typical attention application),
    # fuse that product here as a second (1, Ct, Ts, 128) output to avoid
    # re-reading x from HBM (would roughly halve the module's HBM traffic).
    # TODO(synk): act_type other than ReLU and training-mode BatchNorm
    # (batch statistics) are not implemented.
    """
    B, C, H, W = x.shape
    S = H * W
    itemsize = x.dtype.itemsize
    sub = max(8, 32 // itemsize)             # sublane multiple for this dtype
    params = _fold_affine(conv_w, bn_gamma, bn_beta, bn_mean, bn_var, eps, C)
    budget = _vmem_budget_bytes()
    cost = pl.CostEstimate(flops=B * C * S + 2 * B * S,
                           transcendentals=0,
                           bytes_accessed=(B * C * S + B * S) * itemsize)

    if S % _LANE == 0:
        # ---- Lane-dense path: metadata-only view, no padding copy of x. ----
        R = S // _LANE
        x_view = x.reshape(B, C, R, _LANE)

        # Channel tile: must divide C exactly so the reduction never sums the
        # out-of-bounds tail of a ragged channel block.
        max_ct = max(1, budget // (4 * sub * _LANE * itemsize))
        if max_channel_tile is not None:
            max_ct = min(max_ct, max_channel_tile)
        if C <= max_ct:
            ct = C
        else:
            ct = max(d for d in range(1, max_ct + 1) if C % d == 0)
        n_c = C // ct

        # Spatial tile: largest multiple of `sub` keeping double-buffered
        # input + output + f32 accumulator inside the VMEM budget (amortizes
        # the ~0.35us fixed per-grid-step cost). Ragged last block is fine.
        row_bytes = _LANE * (2 * ct * itemsize + 2 * itemsize + 4)
        if R <= sub:
            ts = R                           # full extent satisfies (8,128) rule
        else:
            ts = (budget // row_bytes) // sub * sub
            if max_spatial_rows is not None:
                ts = min(ts, max_spatial_rows // sub * sub)
            ts = max(sub, ts)
            if ts >= R:
                ts = R
        n_s = _cdiv(R, ts)
        if B == 1 and n_s == 1 and R > sub:
            # Give megacore (v7x, 2 TCs) a second parallel tile to shard.
            ts = max(sub, _cdiv(R, 2) // sub * sub)
            n_s = _cdiv(R, ts)

        out = pl.pallas_call(
            _attn_kernel_tiled,
            out_shape=jax.ShapeDtypeStruct((B, 1, R, _LANE), x.dtype),
            grid=(B, n_s, n_c),
            in_specs=[
                pl.BlockSpec(memory_space=pltpu.MemorySpace.SMEM),   # params (2,)
                pl.BlockSpec((1, ct, ts, _LANE), lambda b, s, c: (b, c, s, 0)),
            ],
            out_specs=pl.BlockSpec((1, 1, ts, _LANE),
                                   lambda b, s, c: (b, 0, s, 0)),
            scratch_shapes=[pltpu.VMEM((ts, _LANE), jnp.float32)],
            compiler_params=pltpu.CompilerParams(
                dimension_semantics=("parallel", "parallel", "arbitrary"),
                vmem_limit_bytes=_VMEM_LIMIT),
            cost_estimate=cost,
        )(params, x_view)
        return out.reshape(B, 1, H, W)

    # ---- Fallback: S not a multiple of 128. 3-D view, ragged last block. ----
    x_flat = x.reshape(B, C, S)              # metadata-only view, no pad copy
    te = max(_LANE, (budget // (4 * C * itemsize)) // _LANE * _LANE)
    if te >= S:
        te = S                               # full extent -> no 128 requirement
    n_s = _cdiv(S, te)
    if B == 1 and n_s == 1 and S > 2 * _LANE:
        te = max(_LANE, _cdiv(S, 2) // _LANE * _LANE)
        n_s = _cdiv(S, te)

    out = pl.pallas_call(
        _attn_kernel_flat,
        out_shape=jax.ShapeDtypeStruct((B, 1, S), x.dtype),
        grid=(B, n_s),
        in_specs=[
            pl.BlockSpec(memory_space=pltpu.MemorySpace.SMEM),       # params (2,)
            pl.BlockSpec((1, C, te), lambda b, s: (b, 0, s)),
        ],
        out_specs=pl.BlockSpec((1, 1, te), lambda b, s: (b, 0, s)),
        compiler_params=pltpu.CompilerParams(
            dimension_semantics=("parallel", "parallel"),
            vmem_limit_bytes=_VMEM_LIMIT),
        cost_estimate=cost,
    )(params, x_flat)
    return out.reshape(B, 1, H, W)


# ---------------------------------------------------------------------------
# Reference + demo
# ---------------------------------------------------------------------------

def _reference(x, conv_w, bn_gamma, bn_beta, bn_mean, bn_var, eps=1e-5):
    cw = jnp.asarray(conv_w, jnp.float32).reshape(())
    g = jnp.asarray(bn_gamma, jnp.float32).reshape(())
    b = jnp.asarray(bn_beta, jnp.float32).reshape(())
    mu = jnp.asarray(bn_mean, jnp.float32).reshape(())
    var = jnp.asarray(bn_var, jnp.float32).reshape(())
    m = jnp.mean(x.astype(jnp.float32), axis=1, keepdims=True)
    z = m * cw
    z = (z - mu) / jnp.sqrt(var + eps) * g + b
    return jnp.maximum(z, 0.0).astype(x.dtype)


if __name__ == "__main__":
    key = jax.random.PRNGKey(0)

    # Parameters with the shapes the PyTorch module would carry:
    #   Conv2d(1, 1, 1, bias=False).weight: (1,1,1,1); BatchNorm2d(1): (1,) each.
    conv_w = jnp.full((1, 1, 1, 1), 0.75, jnp.float32)
    bn_gamma = jnp.full((1,), 1.2, jnp.float32)
    bn_beta = jnp.full((1,), 0.1, jnp.float32)
    bn_mean = jnp.full((1,), 0.05, jnp.float32)
    bn_var = jnp.full((1,), 0.9, jnp.float32)
    bn = (conv_w, bn_gamma, bn_beta, bn_mean, bn_var)

    def check(x, tol, **kw):
        out = jax.block_until_ready(spatial_attention_block(x, *bn, **kw))
        ref = _reference(x, *bn)
        assert out.shape == (x.shape[0], 1, x.shape[2], x.shape[3]), out.shape
        err = float(jnp.max(jnp.abs(out.astype(jnp.float32)
                                    - ref.astype(jnp.float32))))
        assert err <= tol, (x.shape, err)

    k1, k2, k3, k4 = jax.random.split(key, 4)

    # 1) Primary small case (lane-dense path, single tile per axis).
    check(jax.random.normal(k1, (2, 4, 16, 16), jnp.float32), 1e-5)

    # 2) Spatial size not a multiple of 128 (ragged fallback path, no padding).
    check(jax.random.normal(k2, (2, 4, 10, 10), jnp.float32), 1e-5)

    # 3) Forced channel-split accumulator + ragged last spatial tile.
    check(jax.random.normal(k3, (2, 8, 24, 64), jnp.float32), 1e-5,
          max_channel_tile=4, max_spatial_rows=8)

    # 4) bf16 input (per-channel-slice upcast path).
    check(jax.random.normal(k4, (2, 4, 32, 64), jnp.bfloat16), 2e-2)

    print("KERNEL_OK")
</pallas_src>

<mosaic_0001>
module attributes {stable_mosaic.version = 11 : i64} {
  func.func @_attn_kernel_tiled(%arg0: i32, %arg1: i32, %arg2: i32, %arg3: memref<2xf32, #tpu.memory_space<smem>>, %arg4: memref<1x4x2x128xf32, #tpu.memory_space<vmem>>, %arg5: memref<1x1x2x128xf32, #tpu.memory_space<vmem>>, %arg6: memref<2x128xf32, #tpu.memory_space<vmem>>) attributes {dimension_semantics = [#tpu.dimension_semantics<parallel>, #tpu.dimension_semantics<parallel>, #tpu.dimension_semantics<arbitrary>], iteration_bounds = array<i64: 2, 1, 1>, scalar_prefetch = 0 : i64, scratch_operands = 1 : i64, tpu.core_type = #tpu.core_type<tc>, window_params = [{transform_indices = @transform_0, window_bounds = array<i64: 2>}, {transform_indices = @transform_1, window_bounds = array<i64: 1, 4, 2, 128>}, {transform_indices = @transform_2, window_bounds = array<i64: 1, 1, 2, 128>}]} {
    %c0_i32 = arith.constant 0 : i32
    %0 = arith.cmpi eq, %arg2, %c0_i32 : i32
    %1 = arith.extui %0 : i1 to i32
    %c0_i32_0 = arith.constant 0 : i32
    %2 = arith.cmpi ne, %1, %c0_i32_0 : i32
    scf.if %2 {
      %cst = arith.constant 0.000000e+00 : f32
      %20 = vector.broadcast %cst : f32 to vector<2x128xf32>
      %c0_19 = arith.constant 0 : index
      %c0_20 = arith.constant 0 : index
      %21 = vector.load %arg6[%c0_19, %c0_20] : memref<2x128xf32, #tpu.memory_space<vmem>>, vector<2x128xf32>
      tpu.vector_store %arg6[%c0_19, %c0_20], %20 {strides = array<i32>} : memref<2x128xf32, #tpu.memory_space<vmem>>, vector<2x128xf32>,
    } else {
    }
    %c0 = arith.constant 0 : index
    %c0_1 = arith.constant 0 : index
    %3 = vector.load %arg6[%c0, %c0_1] : memref<2x128xf32, #tpu.memory_space<vmem>>, vector<2x128xf32>
    %c0_2 = arith.constant 0 : index
    %c0_3 = arith.constant 0 : index
    %c0_4 = arith.constant 0 : index
    %c0_5 = arith.constant 0 : index
    %4 = vector.load %arg4[%c0_2, %c0_3, %c0_4, %c0_5] : memref<1x4x2x128xf32, #tpu.memory_space<vmem>>, vector<1x1x2x128xf32>
    %5 = vector.shape_cast %4 : vector<1x1x2x128xf32> to vector<2x128xf32>
    %6 = arith.addf %3, %5 : vector<2x128xf32>
    %c0_6 = arith.constant 0 : index
    %c1 = arith.constant 1 : index
    %c0_7 = arith.constant 0 : index
    %c0_8 = arith.constant 0 : index
    %7 = vector.load %arg4[%c0_6, %c1, %c0_7, %c0_8] : memref<1x4x2x128xf32, #tpu.memory_space<vmem>>, vector<1x1x2x128xf32>
    %8 = vector.shape_cast %7 : vector<1x1x2x128xf32> to vector<2x128xf32>
    %9 = arith.addf %6, %8 : vector<2x128xf32>
    %c0_9 = arith.constant 0 : index
    %c2 = arith.constant 2 : index
    %c0_10 = arith.constant 0 : index
    %c0_11 = arith.constant 0 : index
    %10 = vector.load %arg4[%c0_9, %c2, %c0_10, %c0_11] : memref<1x4x2x128xf32, #tpu.memory_space<vmem>>, vector<1x1x2x128xf32>
    %11 = vector.shape_cast %10 : vector<1x1x2x128xf32> to vector<2x128xf32>
    %12 = arith.addf %9, %11 : vector<2x128xf32>
    %c0_12 = arith.constant 0 : index
    %c3 = arith.constant 3 : index
    %c0_13 = arith.constant 0 : index
    %c0_14 = arith.constant 0 : index
    %13 = vector.load %arg4[%c0_12, %c3, %c0_13, %c0_14] : memref<1x4x2x128xf32, #tpu.memory_space<vmem>>, vector<1x1x2x128xf32>
    %14 = vector.shape_cast %13 : vector<1x1x2x128xf32> to vector<2x128xf32>
    %15 = arith.addf %12, %14 : vector<2x128xf32>
    %c0_15 = arith.constant 0 : index
    %c0_16 = arith.constant 0 : index
    %16 = vector.load %arg6[%c0_15, %c0_16] : memref<2x128xf32, #tpu.memory_space<vmem>>, vector<2x128xf32>
    tpu.vector_store %arg6[%c0_15, %c0_16], %15 {strides = array<i32>} : memref<2x128xf32, #tpu.memory_space<vmem>>, vector<2x128xf32>,
    %c0_i32_17 = arith.constant 0 : i32
    %17 = arith.cmpi eq, %arg2, %c0_i32_17 : i32
    %18 = arith.extui %17 : i1 to i32
    %c0_i32_18 = arith.constant 0 : i32
    %19 = arith.cmpi ne, %18, %c0_i32_18 : i32
    scf.if %19 {
      %c0_19 = arith.constant 0 : index
      %20 = memref.load %arg3[%c0_19] : memref<2xf32, #tpu.memory_space<smem>>
      %21 = vector.broadcast %20 : f32 to vector<2x128xf32>
      %22 = arith.mulf %15, %21 : vector<2x128xf32>
      %c1_20 = arith.constant 1 : index
      %23 = memref.load %arg3[%c1_20] : memref<2xf32, #tpu.memory_space<smem>>
      %24 = vector.broadcast %23 : f32 to vector<2x128xf32>
      %25 = arith.addf %22, %24 : vector<2x128xf32>
      %cst = arith.constant 0.000000e+00 : f32
      %26 = vector.broadcast %cst : f32 to vector<2x128xf32>
      %27 = arith.maximumf %25, %26 : vector<2x128xf32>
      %c0_21 = arith.constant 0 : index
      %c0_22 = arith.constant 0 : index
      %c0_23 = arith.constant 0 : index
      %c0_24 = arith.constant 0 : index
      %28 = vector.load %arg5[%c0_21, %c0_22, %c0_23, %c0_24] : memref<1x1x2x128xf32, #tpu.memory_space<vmem>>, vector<1x1x2x128xf32>
      %29 = vector.shape_cast %28 : vector<1x1x2x128xf32> to vector<2x128xf32>
      %30 = vector.shape_cast %27 : vector<2x128xf32> to vector<1x1x2x128xf32>
      tpu.vector_store %arg5[%c0_21, %c0_22, %c0_23, %c0_24], %30 {strides = array<i32>} : memref<1x1x2x128xf32, #tpu.memory_space<vmem>>, vector<1x1x2x128xf32>,
    } else {
    }
    return
  }
  func.func @transform_0(%arg0: i32, %arg1: i32, %arg2: i32) -> i32 {
    %c0_i32 = arith.constant 0 : i32
    %c0_i32_0 = arith.constant 0 : i32
    return %c0_i32 : i32
  }
  func.func @transform_1(%arg0: i32, %arg1: i32, %arg2: i32) -> (i32, i32, i32, i32) {
    %c0_i32 = arith.constant 0 : i32
    %c0_i32_0 = arith.constant 0 : i32
    return %arg0, %arg2, %arg1, %c0_i32 : i32, i32, i32, i32
  }
  func.func @transform_2(%arg0: i32, %arg1: i32, %arg2: i32) -> (i32, i32, i32, i32) {
    %c0_i32 = arith.constant 0 : i32
    %c0_i32_0 = arith.constant 0 : i32
    %c0_i32_1 = arith.constant 0 : i32
    return %arg0, %c0_i32, %arg1, %c0_i32_0 : i32, i32, i32, i32
  }
}

</mosaic_0001>

<llo_original>
// kernel: tpu_custom_call.1
$region0: #{tpu_custom_call.1}
  #allocation0 [shape = 'u32[]', space=smem, size = 0x4, offset = 0x4, fixed_abs, tag = 'smem constant byte address 0x4 - core index']
  #allocation1 [shape = 'u32[72,128]{1,0:T(1,128)}', space=vmem, size = 0x9000, scoped, tag = 'internal scratch']
  #allocation2 [shape = 'f32[2,128]{1,0:T(2,128)}', space=vmem, size = 0x400, scoped, tag = 'scratch operand']
  %s0 = inlined_call_operand.hbm [shape: f32[2], index: 0, kind: input, shape index: {}]
  %s1 = inlined_call_operand.hbm [shape: f32[2,4,2,128], index: 1, kind: input, shape index: {}]
  %s2 = inlined_call_operand.hbm [shape: f32[2,1,2,128], index: 2, kind: output, shape index: {}]
  %s3 = sld [smem:[#allocation0]]
  $region57: #{tpu_custom_call.1} parent=0
    _
  %s5 = ssub.s32 1, %s3
  %s6 = scalar_select 0, %s5, %s3
  $region1: #{tpu_custom_call.1} parent=0
    #allocation3 [shape = 'u8[512]{0}', space=smem, size = 0x200, scoped, tag = 'input window, operand 0, single buffered']
    #allocation4 [shape = 's32[2]{0}', space=sflag, size = 0x8, scoped, tag = 'scoped memory for tpu_custom_call.1']
    #allocation5 [shape = 's32[2]{0}', space=sflag, size = 0x8, scoped, tag = 'scoped memory for tpu_custom_call.1']
    #allocation6 [shape = 's32[2]{0}', space=sflag, size = 0x8, scoped, tag = 'scoped memory for tpu_custom_call.1']
    #allocation7 [shape = 'u8[8192]{0}', space=vmem, size = 0x2000, scoped, tag = 'input window, operand 1']
    #allocation8 [shape = 'u8[2048]{0}', space=vmem, size = 0x800, scoped, tag = 'output window, operand 0']
    %7 = vsyncpa [#allocation6], 0
    %8 = vsyncpa [#allocation4], 0
    %s9 = scalar_lea.sflag [#allocation4], 1
    %10 = vsyncpa %s9, 0
    %11 = vsyncpa [#allocation5], 0
    %s12 = scalar_lea.sflag [#allocation5], 1
    %13 = vsyncpa %s12, 0
    loop: start=0, step=1, limit=4
    $region2: #{tpu_custom_call.1} parent=1 // loop_pre_header
      _
    $region3: #{tpu_custom_call.1} parent=1 // loop_header
      %s15 = sphi 0, %s19
      %p16 = scmp.ge.s32.totalorder %s15, 4
      %s22 = sphi 0, %s41
      %s23 = sphi 0, %s37
      %s24 = sphi 0, %s33
      %s25 = sphi 0, %s22
      %s26 = sphi 0, %s23
      %s27 = sphi 0, %s24
      %s28 = sphi 0, %s25
      %s29 = sphi 0, %s26
      %s30 = sphi 0, %s27
      %s42 = sphi 0, %s42
      %s44 = sphi 0, %s42
      %s45 = sphi 0, %s44
      %s59 = sphi 0, %s45
      %s69 = sphi 0, %s71
      %s72 = sphi 0, %s69
      %s73 = sphi 0, %s72
      %s89 = sphi 0, %s73
      %s97 = sphi 0, %s99
      %s100 = sphi 0, %s97
      %s101 = sphi 0, %s100
      %s117 = sphi 0, %s101
    $region4: #{tpu_custom_call.1} parent=1 // loop_header_branch
      %18 = sbr.rel (%p16) target = $region8
    $region5: #{tpu_custom_call.1} parent=1 // loop_body
      %s20 = ssub.s32 %s15, 1
      %s21 = ssub.s32 %s15, 2
      %s31 = sadd.s32 1, %s24
      %p32 = scmp.ge.s32.totalorder %s31, 1
      %s33 = scalar_select %p32, 0, %s31
      %s34 = sadd.s32 1, %s23
      %s35 = scalar_select %p32, %s34, %s23
      %p36 = scmp.ge.s32.totalorder %s35, 1
      %s37 = scalar_select %p36, 0, %s35
      %s38 = sadd.s32 1, %s22
      %s39 = scalar_select %p36, %s38, %s22
      %p40 = scmp.ge.s32.totalorder %s39, 2
      %s41 = scalar_select %p40, 0, %s39
      %s43 = sadd.s32 %s42, 1
      %p46 = scmp.eq.s32.totalorder %s15, 1
      %p47 = scmp.ne.s32.totalorder %s42, %s44
      %p48 = scmp.eq.s32.totalorder %s15, 0
      %p49 = por %p47, %p48
      %p50 = scmp.ne.s32.totalorder %s42, %s44
      %p51 = scmp.eq.s32.totalorder %s20, 1
      %p52 = por %p50, %p51
      %p53 = scmp.ne.s32.totalorder %s44, %s45
      %p54 = scmp.eq.s32.totalorder %s20, 0
      %p55 = por %p53, %p54
      %p56 = scmp.ne.s32.totalorder %s44, %s45
      %p57 = scmp.eq.s32.totalorder %s21, 1
      %p58 = por %p56, %p57
      %p60 = scmp.ne.s32.totalorder %s45, %s59
      %p61 = scmp.eq.s32.totalorder %s21, 0
      %p62 = por %p60, %p61
      %s63 = ssub.s32 %s22, %s41
      %s64 = ssub.s32 %s24, %s33
      %s65 = sor.u32 %s63, %s64
      %s66 = ssub.s32 %s23, %s37
      %s67 = sor.u32 %s65, %s66
      %p68 = scmp.eq.s32.totalorder %s67, 0
      %s70 = sadd.s32 %s69, 1
      %s71 = scalar_select %p68, %s69, %s70
      %p74 = pneg %p68
      %p75 = scmp.eq.s32.totalorder %s15, 1
      %p76 = por %p74, %p75
      %p77 = scmp.ne.s32.totalorder %s69, %s72
      %p78 = scmp.eq.s32.totalorder %s15, 0
      %p79 = por %p77, %p78
      %p80 = scmp.ne.s32.totalorder %s69, %s72
      %p81 = scmp.eq.s32.totalorder %s20, 1
      %p82 = por %p80, %p81
      %p83 = scmp.ne.s32.totalorder %s72, %s73
      %p84 = scmp.eq.s32.totalorder %s20, 0
      %p85 = por %p83, %p84
      %p86 = scmp.ne.s32.totalorder %s72, %s73
      %p87 = scmp.eq.s32.totalorder %s21, 1
      %p88 = por %p86, %p87
      %p90 = scmp.ne.s32.totalorder %s73, %s89
      %p91 = scmp.eq.s32.totalorder %s21, 0
      %p92 = por %p90, %p91
      %s93 = ssub.s32 %s22, %s41
      %s94 = ssub.s32 %s23, %s37
      %s95 = sor.u32 %s93, %s94
      %p96 = scmp.eq.s32.totalorder %s95, 0
      %s98 = sadd.s32 %s97, 1
      %s99 = scalar_select %p96, %s97, %s98
      %p102 = pneg %p96
      %p103 = scmp.eq.s32.totalorder %s15, 1
      %p104 = por %p102, %p103
      %p105 = scmp.ne.s32.totalorder %s97, %s100
      %p106 = scmp.eq.s32.totalorder %s15, 0
      %p107 = por %p105, %p106
      %p108 = scmp.ne.s32.totalorder %s97, %s100
      %p109 = scmp.eq.s32.totalorder %s20, 1
      %p110 = por %p108, %p109
      %p111 = scmp.ne.s32.totalorder %s100, %s101
      %p112 = scmp.eq.s32.totalorder %s20, 0
      %p113 = por %p111, %p112
      %p114 = scmp.ne.s32.totalorder %s100, %s101
      %p115 = scmp.eq.s32.totalorder %s21, 1
      %p116 = por %p114, %p115
      %p118 = scmp.ne.s32.totalorder %s101, %s117
      %p119 = scmp.eq.s32.totalorder %s21, 0
      %p120 = por %p118, %p119
      %p121 = scmp.le.s32.totalorder 1, %s15
      %p122 = scmp.lt.s32.totalorder %s15, 3
      %p123 = pnand %p121, %p122
      %p124 = pneg %p123
      // Predicated region
      $region9: #{tpu_custom_call.1} parent=5 // pred_check
        _
      $region10: #{tpu_custom_call.1} parent=5 // pred_check_branch
        %126 = sbr.rel (%p123) target = $region12
      $region11: #{tpu_custom_call.1} parent=5 // pred_region
        %s127 = ssub.s32 %s15, 1
        // Predicated region
        $region13: #{tpu_custom_call.1} parent=11 // pred_check
          %p128 = pneg %p55
        $region14: #{tpu_custom_call.1} parent=11 // pred_check_branch
          %130 = sbr.rel (%p128) target = $region16
        $region15: #{tpu_custom_call.1} parent=11 // pred_region
          %132 = vsyncadd [#allocation6], 0
          %s134 = sshll.u32 %s0, 4
          %s135 = int_to_ptr.hbm [resolvable:$true] %s134
          %137 = dma.hbm_to_smem %s135, 16, [#allocation3], [#allocation6]
        $region16: #{tpu_custom_call.1} parent=11 // pred_fallthru
          _
      $region12: #{tpu_custom_call.1} parent=5 // pred_fallthru
        _
      %p138 = scmp.lt.s32.totalorder %s15, 2
      // Predicated region
      $region17: #{tpu_custom_call.1} parent=5 // pred_check
        %p139 = pneg %p138
      $region18: #{tpu_custom_call.1} parent=5 // pred_check_branch
        %141 = sbr.rel (%p139) target = $region20
      $region19: #{tpu_custom_call.1} parent=5 // pred_region
        // Predicated region
        $region21: #{tpu_custom_call.1} parent=19 // pred_check
          %p142 = pneg %p79
        $region22: #{tpu_custom_call.1} parent=19 // pred_check_branch
          %144 = sbr.rel (%p142) target = $region24
        $region23: #{tpu_custom_call.1} parent=19 // pred_region
          %s145 = sand.u32 %s69, 1
          %s146 = scalar_lea.sflag [#allocation4], %s145
          %s147 = sand.u32 %s69, 1
          %s148 = smul.addr %s147, 8
          %s149 = scalar_lea.vmem [#allocation7], %s148
          %s150 = smul.u32 4, %s24
          %152 = vsyncadd %s146, 0
          %s153 = sadd.s32 %s23, %s150
          %s154 = smul.addr %s22, 4
          %s155 = sadd.s32 %s153, %s154
          %s156 = smul.addr %s155, 2
          %s157 = scalar_lea.hbm %s1, %s156
          %s158 = sshll.u32 %s157, 4
          %s159 = int_to_ptr.hbm [resolvable:$true] %s158
          %s160 = sshll.u32 %s149, 4
          %s161 = int_to_ptr.vmem [resolvable:$true] %s160
          %166 = dma.hbm_to_vmem [thread:$0]  %s159, 128, %s161, %s146, 32, 32, 2
        $region24: #{tpu_custom_call.1} parent=19 // pred_fallthru
          _
      $region20: #{tpu_custom_call.1} parent=5 // pred_fallthru
        _
      %p167 = scmp.le.s32.totalorder 1, %s15
      %p168 = scmp.lt.s32.totalorder %s15, 3
      %p169 = pnand %p167, %p168
      %p170 = pneg %p169
      // Predicated region
      $region25: #{tpu_custom_call.1} parent=5 // pred_check
        _
      $region26: #{tpu_custom_call.1} parent=5 // pred_check_branch
        %172 = sbr.rel (%p169) target = $region28
      $region27: #{tpu_custom_call.1} parent=5 // pred_region
        %s173 = ssub.s32 %s15, 1
        // Predicated region
        $region29: #{tpu_custom_call.1} parent=27 // pred_check
          %p174 = pneg %p55
        $region30: #{tpu_custom_call.1} parent=27 // pred_check_branch
          %176 = sbr.rel (%p174) target = $region32
        $region31: #{tpu_custom_call.1} parent=27 // pred_region
          %178 = dma.done [#allocation6], 16
        $region32: #{tpu_custom_call.1} parent=27 // pred_fallthru
          _
        %s179 = sand.u32 %s72, 1
        %s180 = scalar_lea.sflag [#allocation4], %s179
        %s181 = sand.u32 %s72, 1
        %s182 = smul.addr %s181, 8
        %s183 = scalar_lea.vmem [#allocation7], %s182
        // Predicated region
        $region33: #{tpu_custom_call.1} parent=27 // pred_check
          %p184 = pneg %p85
        $region34: #{tpu_custom_call.1} parent=27 // pred_check_branch
          %186 = sbr.rel (%p184) target = $region36
        $region35: #{tpu_custom_call.1} parent=27 // pred_region
          %188 = dma.done %s180, 128
        $region36: #{tpu_custom_call.1} parent=27 // pred_fallthru
          _
        %189 = sfence
        %p190 = pneg %p55
        %p191 = pneg %p52
        %s192 = sand.u32 %s72, 1
        %s193 = scalar_lea.sflag [#allocation4], %s192
        %s194 = sand.u32 %s72, 1
        %s195 = smul.addr %s194, 8
        %s196 = scalar_lea.vmem [#allocation7], %s195
        %p197 = pneg %p85
        %p198 = pneg %p82
        %p199 = pneg %p113
        %p200 = pneg %p110
        %s201 = sand.u32 %s100, 1
        %s202 = scalar_lea.sflag [#allocation5], %s201
        %s203 = sand.u32 %s100, 1
        %s204 = smul.addr %s203, 2
        %s205 = scalar_lea.vmem [#allocation8], %s204
        %s206 = smul.u32 4, %s27
        %p207 = scmp.eq.s32.totalorder %s27, 0
        // Predicated region
        $region37: #{tpu_custom_call.1} parent=27 // pred_check
          %p208 = pneg %p207
        $region38: #{tpu_custom_call.1} parent=27 // pred_check_branch
          %210 = sbr.rel (%p208) target = $region40
        $region39: #{tpu_custom_call.1} parent=27 // pred_region
          %211 = vst [vmem:[#allocation2] sm:$0x3] 0.0
        $region40: #{tpu_custom_call.1} parent=27 // pred_fallthru
          _
        %v212 = vld [vmem:[#allocation2] sm:$0x3]
        %v213 = vld [vmem:[%s183] sm:$0x3]
        %v214 = vadd.f32 %v212, %v213
        %s215 = scalar_lea.vmem %s183, 2 [#allocation7]
        %v216 = vld [vmem:[%s215] sm:$0x3]
        %v217 = vadd.f32 %v214, %v216
        %s218 = scalar_lea.vmem %s183, 4 [#allocation7]
        %v219 = vld [vmem:[%s218] sm:$0x3]
        %v220 = vadd.f32 %v217, %v219
        %s221 = scalar_lea.vmem %s183, 6 [#allocation7]
        %v222 = vld [vmem:[%s221] sm:$0x3]
        %v223 = vadd.f32 %v220, %v222
        %224 = vst [vmem:[#allocation2] sm:$0x3] %v223
        // Predicated region
        $region41: #{tpu_custom_call.1} parent=27 // pred_check
          %p225 = pneg %p207
        $region42: #{tpu_custom_call.1} parent=27 // pred_check_branch
          %227 = sbr.rel (%p225) target = $region44
        $region43: #{tpu_custom_call.1} parent=27 // pred_region
          %s228 = sld [smem:[#allocation3]]
          %v229 = vstv %s228
          %v230 = vmul.f32 %v223, %v229
          %s231 = sld [smem:[#allocation3 + $0x1]]
          %v232 = vstv %s231
          %v233 = vadd.f32 %v230, %v232
          %v234 = vmax.f32 %v233, 0.0
          %235 = vst [vmem:[%s205] sm:$0x3] %v234
        $region44: #{tpu_custom_call.1} parent=27 // pred_fallthru
          _
        %s236 = sand.u32 %s100, 1
        %s237 = scalar_lea.sflag [#allocation5], %s236
        %s238 = sand.u32 %s100, 1
        %s239 = smul.addr %s238, 2
        %s240 = scalar_lea.vmem [#allocation8], %s239
        // Predicated region
        $region45: #{tpu_custom_call.1} parent=27 // pred_check
          %p241 = pneg %p110
        $region46: #{tpu_custom_call.1} parent=27 // pred_check_branch
          %243 = sbr.rel (%p241) target = $region48
        $region47: #{tpu_custom_call.1} parent=27 // pred_region
          %245 = vsyncadd %s237, 0
          %s246 = sadd.s32 %s26, %s25
          %s247 = smul.addr %s246, 2
          %s248 = scalar_lea.hbm %s2, %s247
          %s250 = sshll.u32 %s240, 4
          %s251 = int_to_ptr.vmem [resolvable:$true] %s250
          %s252 = sshll.u32 %s248, 4
          %s253 = int_to_ptr.hbm [resolvable:$true] %s252
          %255 = dma.vmem_to_hbm [thread:$0]  %s251, 32, %s253, %s237
        $region48: #{tpu_custom_call.1} parent=27 // pred_fallthru
          _
      $region28: #{tpu_custom_call.1} parent=5 // pred_fallthru
        _
      %p256 = scmp.le.s32.totalorder 2, %s15
      // Predicated region
      $region49: #{tpu_custom_call.1} parent=5 // pred_check
        %p257 = pneg %p256
      $region50: #{tpu_custom_call.1} parent=5 // pred_check_branch
        %259 = sbr.rel (%p257) target = $region52
      $region51: #{tpu_custom_call.1} parent=5 // pred_region
        %s260 = ssub.s32 %s15, 2
        // Predicated region
        $region53: #{tpu_custom_call.1} parent=51 // pred_check
          %p261 = pneg %p116
        $region54: #{tpu_custom_call.1} parent=51 // pred_check_branch
          %263 = sbr.rel (%p261) target = $region56
        $region55: #{tpu_custom_call.1} parent=51 // pred_region
          %s264 = sand.u32 %s101, 1
          %s265 = scalar_lea.sflag [#allocation5], %s264
          %s266 = sand.u32 %s101, 1
          %s267 = smul.addr %s266, 2
          %s268 = scalar_lea.vmem [#allocation8], %s267
          %270 = dma.done %s265, 32
        $region56: #{tpu_custom_call.1} parent=51 // pred_fallthru
          _
      $region52: #{tpu_custom_call.1} parent=5 // pred_fallthru
        _
    $region6: #{tpu_custom_call.1} parent=1 // loop_footer
      %s19 = sadd.s32 1, %s15
    $region7: #{tpu_custom_call.1} parent=1 // loop_footer_branch
      %14 = sbr.rel target = $region3
    $region8: #{tpu_custom_call.1} parent=1 // loop_exit
      _
    %271 = vsyncpa [#allocation4], 1
    %s272 = scalar_lea.sflag [#allocation4], 1
    %273 = vsyncpa %s272, 1
    %274 = vsyncpa [#allocation5], 1
    %s275 = scalar_lea.sflag [#allocation5], 1
    %276 = vsyncpa %s275, 1
    %277 = vsyncpa [#allocation6], 1
    %s278 = scalar_lea.sflag [#allocation6], 1
    %279 = vsyncpa %s278, 1

</llo_original>
